<compile_context>
chip_gen: v5e
topology: v5e:2x2
jax: 0.10.0
libtpu: 0.0.40
codegen_flags: <defaults>
</compile_context>

<pallas_src>
import functools

import jax
import jax.numpy as jnp
from jax.experimental import pallas as pl
from jax.experimental.pallas import tpu as pltpu

LANE = 128                    # TPU lane width; weight feature dims padded to this
IN_DIM = 12                   # Net.input_state
PARAM_ROWS = 3 * LANE + 8     # W1 | W2 | W3 (128 rows each) + one (8,128) bias block


def _round_up(n, m):
    return ((n + m - 1) // m) * m


def mlp_kernel(x_ref, p_ref, out_ref, xpad_ref, *, num_actions):
    """Fused 3-layer MLP on one batch tile.

    x_ref:    (Bt, 12)           narrow input rows straight from HBM
    p_ref:    (392, 128)         packed parameter slab: [W1; W2; W3; bias block]
    out_ref:  (Bt, num_actions)  narrow output (only valid lanes written back)
    xpad_ref: (Bt, 128)          VMEM scratch: input zero-padded to lane width
    """
    # Zero-pad features 12 -> 128 entirely in VMEM (no HBM padding traffic).
    # Zeroed every iteration so the kernel stays correct under megacore grid
    # sharding (a core may never see grid step 0).
    xpad_ref[...] = jnp.zeros_like(xpad_ref)
    xpad_ref[:, 0:IN_DIM] = x_ref[...]
    x = xpad_ref[...]

    # Static slices of the resident parameter slab (no extra DMAs).
    w1 = p_ref[0:LANE, :]                       # (128, 128)
    w2 = p_ref[LANE:2 * LANE, :]                # (128, 128)
    w3 = p_ref[2 * LANE:3 * LANE, :]            # (128, 128)
    bias = p_ref[3 * LANE:3 * LANE + 8, :]      # (8, 128): rows 0/1/2 = b1/b2/b3
    b1 = bias[0:1, :]
    b2 = bias[1:2, :]
    b3 = bias[2:3, :]

    h1 = jnp.maximum(jnp.dot(x, w1, preferred_element_type=jnp.float32) + b1, 0.0)
    h2 = jnp.maximum(jnp.dot(h1, w2, preferred_element_type=jnp.float32) + b2, 0.0)
    q = jnp.dot(h2, w3, preferred_element_type=jnp.float32) + b3          # (Bt, 128)
    out_ref[...] = q[:, :num_actions].astype(out_ref.dtype)               # (Bt, A)


def pack_params(params, num_actions):
    """Pack (in,out)-layout weights + biases into one lane-padded f32 slab."""
    w1, b1 = params["w1"], params["b1"]
    w2, b2 = params["w2"], params["b2"]
    w3, b3 = params["w3"], params["b3"]
    assert w1.shape == (IN_DIM, 32)
    hidden = w2.shape[1]
    assert w2.shape[0] == 32 and hidden <= LANE
    assert w3.shape == (hidden, num_actions) and num_actions <= LANE

    slab = jnp.zeros((PARAM_ROWS, LANE), jnp.float32)
    slab = slab.at[0:IN_DIM, 0:32].set(w1)
    slab = slab.at[LANE:LANE + 32, 0:hidden].set(w2)
    slab = slab.at[2 * LANE:2 * LANE + hidden, 0:num_actions].set(w3)
    slab = slab.at[3 * LANE + 0, 0:32].set(b1.reshape(-1))
    slab = slab.at[3 * LANE + 1, 0:hidden].set(b2.reshape(-1))
    slab = slab.at[3 * LANE + 2, 0:num_actions].set(b3.reshape(-1))
    return slab


@functools.partial(jax.jit, static_argnames=("num_actions", "block_b"))
def net_forward(states, packed_params, num_actions, block_b=2048):
    """states: (B, 12) f32; packed_params: (392, 128) f32 slab from pack_params."""
    B = states.shape[0]
    B8 = _round_up(B, 8)                               # sublane-aligned batch
    blk = max(8, _round_up(min(block_b, 8192), 8))     # 8-aligned, VMEM-safe cap
    Bt = min(blk, B8)
    # v7x megacore: if everything would fit in one grid step, split the batch in
    # two so dimension_semantics=("parallel",) gives both TensorCores work.
    if Bt == B8 and B8 >= 16:
        Bt = _round_up((B8 + 1) // 2, 8)
    B_pad = _round_up(B, Bt)

    # Row-only padding (tiny: (B_pad-B)*12*4 bytes); no 128-lane pad in HBM.
    x_in = states if B_pad == B else jnp.pad(states, ((0, B_pad - B), (0, 0)))

    out = pl.pallas_call(
        functools.partial(mlp_kernel, num_actions=num_actions),
        out_shape=jax.ShapeDtypeStruct((B_pad, num_actions), jnp.float32),
        grid_spec=pltpu.PrefetchScalarGridSpec(
            num_scalar_prefetch=0,
            grid=(B_pad // Bt,),
            in_specs=[
                # narrow input: last block dim == full array dim (12) is legal
                pl.BlockSpec((Bt, IN_DIM), lambda i: (i, 0)),
                # parameter slab: constant index_map -> resident across the grid
                pl.BlockSpec((PARAM_ROWS, LANE), lambda i: (0, 0)),
            ],
            # narrow output: only num_actions lanes are ever written to HBM
            out_specs=pl.BlockSpec((Bt, num_actions), lambda i: (i, 0)),
            scratch_shapes=[pltpu.VMEM((Bt, LANE), jnp.float32)],
        ),
        compiler_params=pltpu.CompilerParams(
            dimension_semantics=("parallel",)),   # shards batch tiles across TCs on v7x
    )(x_in, packed_params)

    return out if B_pad == B else out[:B]


def init_params(key, num_actions=4, hidden_layer_size=50, input_state=IN_DIM):
    """Deterministic synthetic init (PyTorch-style uniform fan-in bound).
    Weights stored as (in_features, out_features), i.e. transposed vs. PyTorch."""
    def linear(k, fan_in, fan_out):
        kw, kb = jax.random.split(k)
        bound = 1.0 / jnp.sqrt(jnp.float32(fan_in))
        w = jax.random.uniform(kw, (fan_in, fan_out), jnp.float32, -bound, bound)
        b = jax.random.uniform(kb, (fan_out,), jnp.float32, -bound, bound)
        return w, b

    k1, k2, k3 = jax.random.split(key, 3)
    w1, b1 = linear(k1, input_state, 32)
    w2, b2 = linear(k2, 32, hidden_layer_size)
    w3, b3 = linear(k3, hidden_layer_size, num_actions)
    return {"w1": w1, "b1": b1, "w2": w2, "b2": b2, "w3": w3, "b3": b3}


def net_forward_ref(x, params):
    """Pure-JAX reference for correctness checking."""
    h1 = jnp.maximum(x @ params["w1"] + params["b1"], 0.0)
    h2 = jnp.maximum(h1 @ params["w2"] + params["b2"], 0.0)
    return h2 @ params["w3"] + params["b3"]


if __name__ == "__main__":
    key = jax.random.PRNGKey(0)
    k_params, k_x1, k_x2 = jax.random.split(key, 3)

    num_actions = 4
    hidden = 50

    params = init_params(k_params, num_actions=num_actions, hidden_layer_size=hidden)
    packed = pack_params(params, num_actions=num_actions)

    # Small batch (single grid step).
    states = jax.random.normal(k_x1, (8, IN_DIM), jnp.float32)
    q_values = jax.block_until_ready(net_forward(states, packed, num_actions))
    q_ref = net_forward_ref(states, params)
    assert q_values.shape == (8, num_actions)
    assert jnp.allclose(q_values, q_ref, atol=1e-5, rtol=1e-5), "mismatch (batch=8)"

    # Ragged batch (exercises row padding + multi-step parallel grid).
    states2 = jax.random.normal(k_x2, (50, IN_DIM), jnp.float32)
    q2 = jax.block_until_ready(net_forward(states2, packed, num_actions))
    q2_ref = net_forward_ref(states2, params)
    assert q2.shape == (50, num_actions)
    assert jnp.allclose(q2, q2_ref, atol=1e-5, rtol=1e-5), "mismatch (batch=50)"

    print("KERNEL_OK")
</pallas_src>

<mosaic_0001>
module attributes {stable_mosaic.version = 11 : i64} {
  func.func @mlp_kernel(%arg0: i32, %arg1: memref<8x12xf32, #tpu.memory_space<vmem>>, %arg2: memref<392x128xf32, #tpu.memory_space<vmem>>, %arg3: memref<8x4xf32, #tpu.memory_space<vmem>>, %arg4: memref<8x128xf32, #tpu.memory_space<vmem>>) attributes {dimension_semantics = [#tpu.dimension_semantics<parallel>], iteration_bounds = array<i64: 1>, scalar_prefetch = 0 : i64, scratch_operands = 1 : i64, tpu.core_type = #tpu.core_type<tc>, window_params = [{transform_indices = @transform_0, window_bounds = array<i64: 8, 12>}, {pipeline_mode = #tpu.pipeline_mode<synchronous>, transform_indices = @transform_1, window_bounds = array<i64: 392, 128>}, {transform_indices = @transform_2, window_bounds = array<i64: 8, 4>}]} {
    %cst = arith.constant 0.000000e+00 : f32
    %0 = vector.broadcast %cst : f32 to vector<8x128xf32>
    %c0 = arith.constant 0 : index
    %c0_0 = arith.constant 0 : index
    %1 = vector.load %arg4[%c0, %c0_0] : memref<8x128xf32, #tpu.memory_space<vmem>>, vector<8x128xf32>
    tpu.vector_store %arg4[%c0, %c0_0], %0 {strides = array<i32>} : memref<8x128xf32, #tpu.memory_space<vmem>>, vector<8x128xf32>,
    %c0_1 = arith.constant 0 : index
    %c0_2 = arith.constant 0 : index
    %2 = vector.load %arg1[%c0_1, %c0_2] : memref<8x12xf32, #tpu.memory_space<vmem>>, vector<8x12xf32>
    %c0_3 = arith.constant 0 : index
    %c0_4 = arith.constant 0 : index
    %3 = vector.load %arg4[%c0_3, %c0_4] : memref<8x128xf32, #tpu.memory_space<vmem>>, vector<8x12xf32>
    tpu.vector_store %arg4[%c0_3, %c0_4], %2 {strides = array<i32>} : memref<8x128xf32, #tpu.memory_space<vmem>>, vector<8x12xf32>,
    %c0_5 = arith.constant 0 : index
    %c0_6 = arith.constant 0 : index
    %4 = vector.load %arg4[%c0_5, %c0_6] : memref<8x128xf32, #tpu.memory_space<vmem>>, vector<8x128xf32>
    %c0_7 = arith.constant 0 : index
    %c0_8 = arith.constant 0 : index
    %5 = vector.load %arg2[%c0_7, %c0_8] : memref<392x128xf32, #tpu.memory_space<vmem>>, vector<128x128xf32>
    %c128 = arith.constant 128 : index
    %c0_9 = arith.constant 0 : index
    %6 = vector.load %arg2[%c128, %c0_9] : memref<392x128xf32, #tpu.memory_space<vmem>>, vector<128x128xf32>
    %c256 = arith.constant 256 : index
    %c0_10 = arith.constant 0 : index
    %7 = vector.load %arg2[%c256, %c0_10] : memref<392x128xf32, #tpu.memory_space<vmem>>, vector<128x128xf32>
    %c384 = arith.constant 384 : index
    %c0_11 = arith.constant 0 : index
    %8 = vector.load %arg2[%c384, %c0_11] : memref<392x128xf32, #tpu.memory_space<vmem>>, vector<8x128xf32>
    %9 = vector.extract_strided_slice %8 {offsets = [0, 0], sizes = [1, 128], strides = [1, 1]} : vector<8x128xf32> to vector<1x128xf32>
    %10 = vector.extract_strided_slice %8 {offsets = [1, 0], sizes = [1, 128], strides = [1, 1]} : vector<8x128xf32> to vector<1x128xf32>
    %11 = vector.extract_strided_slice %8 {offsets = [2, 0], sizes = [1, 128], strides = [1, 1]} : vector<8x128xf32> to vector<1x128xf32>
    %cst_12 = arith.constant dense<0.000000e+00> : vector<8x128xf32>
    %12 = tpu.matmul %4, %5, %cst_12 {dimension_numbers = #tpu.dot_dimension_numbers<[1], [0], [0], [1], [0, 0, 1, 1], [], []>} : vector<8x128xf32>, vector<128x128xf32>, vector<8x128xf32> -> vector<8x128xf32>
    %13 = vector.broadcast %9 : vector<1x128xf32> to vector<8x128xf32>
    %14 = arith.addf %12, %13 : vector<8x128xf32>
    %cst_13 = arith.constant 0.000000e+00 : f32
    %15 = vector.broadcast %cst_13 : f32 to vector<8x128xf32>
    %16 = arith.maximumf %14, %15 : vector<8x128xf32>
    %cst_14 = arith.constant dense<0.000000e+00> : vector<8x128xf32>
    %17 = tpu.matmul %16, %6, %cst_14 {dimension_numbers = #tpu.dot_dimension_numbers<[1], [0], [0], [1], [0, 0, 1, 1], [], []>} : vector<8x128xf32>, vector<128x128xf32>, vector<8x128xf32> -> vector<8x128xf32>
    %18 = vector.broadcast %10 : vector<1x128xf32> to vector<8x128xf32>
    %19 = arith.addf %17, %18 : vector<8x128xf32>
    %cst_15 = arith.constant 0.000000e+00 : f32
    %20 = vector.broadcast %cst_15 : f32 to vector<8x128xf32>
    %21 = arith.maximumf %19, %20 : vector<8x128xf32>
    %cst_16 = arith.constant dense<0.000000e+00> : vector<8x128xf32>
    %22 = tpu.matmul %21, %7, %cst_16 {dimension_numbers = #tpu.dot_dimension_numbers<[1], [0], [0], [1], [0, 0, 1, 1], [], []>} : vector<8x128xf32>, vector<128x128xf32>, vector<8x128xf32> -> vector<8x128xf32>
    %23 = vector.broadcast %11 : vector<1x128xf32> to vector<8x128xf32>
    %24 = arith.addf %22, %23 : vector<8x128xf32>
    %25 = vector.extract_strided_slice %24 {offsets = [0, 0], sizes = [8, 4], strides = [1, 1]} : vector<8x128xf32> to vector<8x4xf32>
    %c0_17 = arith.constant 0 : index
    %c0_18 = arith.constant 0 : index
    %26 = vector.load %arg3[%c0_17, %c0_18] : memref<8x4xf32, #tpu.memory_space<vmem>>, vector<8x4xf32>
    tpu.vector_store %arg3[%c0_17, %c0_18], %25 {strides = array<i32>} : memref<8x4xf32, #tpu.memory_space<vmem>>, vector<8x4xf32>,
    return
  }
  func.func @transform_0(%arg0: i32) -> (i32, i32) {
    %c0_i32 = arith.constant 0 : i32
    %c0_i32_0 = arith.constant 0 : i32
    return %arg0, %c0_i32 : i32, i32
  }
  func.func @transform_1(%arg0: i32) -> (i32, i32) {
    %c0_i32 = arith.constant 0 : i32
    %c0_i32_0 = arith.constant 0 : i32
    %c0_i32_1 = arith.constant 0 : i32
    return %c0_i32, %c0_i32_0 : i32, i32
  }
  func.func @transform_2(%arg0: i32) -> (i32, i32) {
    %c0_i32 = arith.constant 0 : i32
    %c0_i32_0 = arith.constant 0 : i32
    return %arg0, %c0_i32 : i32, i32
  }
}

</mosaic_0001>

<llo_original>
// kernel: net_forward.1
$region0: #{net_forward.1}
  #allocation0 [shape = 'u32[]', space=smem, size = 0x4, offset = 0x4, fixed_abs, tag = 'smem constant byte address 0x4 - core index']
  #allocation1 [shape = 'u32[72,128]{1,0:T(1,128)}', space=vmem, size = 0x9000, scoped, tag = 'internal scratch']
  #allocation2 [shape = 'f32[8,128]{1,0:T(8,128)}', space=vmem, size = 0x1000, scoped, tag = 'scratch operand']
  %s0 = inlined_call_operand.hbm [shape: f32[8,12], index: 0, kind: input, shape index: {}]
  %s1 = inlined_call_operand.hbm [shape: f32[392,128], index: 1, kind: input, shape index: {}]
  %s2 = inlined_call_operand.vmem [shape: f32[8,4], index: 2, kind: output, shape index: {}]
  %s3 = sld [smem:[#allocation0]]
  $region26: #{net_forward.1} parent=0
    _
  %s5 = ssub.s32 1, %s3
  %s6 = scalar_select 0, %s5, %s3
  $region1: #{net_forward.1} parent=0
    #allocation3 [shape = 'u8[4096]{0}', space=vmem, size = 0x1000, scoped, tag = 'input window, operand 0, single buffered']
    #allocation4 [shape = 's32[1]{0}', space=sflag, size = 0x4, scoped, tag = 'scoped memory for net_forward.1']
    #allocation5 [shape = 'u8[200704]{0}', space=vmem, size = 0x31000, scoped, tag = 'input window, operand 1, single buffered']
    #allocation6 [shape = 's32[1]{0}', space=sflag, size = 0x4, scoped, tag = 'scoped memory for net_forward.1']
    %7 = vsyncpa [#allocation4], 0
    %8 = vsyncpa [#allocation6], 0
    // Predicated region
    $region2: #{net_forward.1} parent=1 // pred_check
      _
    $region3: #{net_forward.1} parent=1 // pred_check_branch
      %10 = sbr.rel (0) target = $region5
    $region4: #{net_forward.1} parent=1 // pred_region
      %12 = vsyncadd [#allocation4], 0
      %s14 = sshll.u32 %s0, 4
      %s15 = int_to_ptr.hbm [resolvable:$true] %s14
      %s16 = sshll.u32 [#allocation3], 4
      %s17 = int_to_ptr.vmem [resolvable:$true] %s16
      %19 = dma.hbm_to_vmem [thread:$0]  %s15, 128, %s17, [#allocation4]
    $region5: #{net_forward.1} parent=1 // pred_fallthru
      _
    // Predicated region
    $region6: #{net_forward.1} parent=1 // pred_check
      _
    $region7: #{net_forward.1} parent=1 // pred_check_branch
      %21 = sbr.rel (0) target = $region9
    $region8: #{net_forward.1} parent=1 // pred_region
      %23 = vsyncadd [#allocation6], 0
      %s24 = sshll.u32 %s1, 4
      %s25 = int_to_ptr.hbm [resolvable:$true] %s24
      %s26 = sshll.u32 [#allocation5], 4
      %s27 = int_to_ptr.vmem [resolvable:$true] %s26
      %32 = dma.hbm_to_vmem [thread:$0]  %s25, 6272, %s27, [#allocation6], 128, 128, 8
    $region9: #{net_forward.1} parent=1 // pred_fallthru
      _
    // Predicated region
    $region10: #{net_forward.1} parent=1 // pred_check
      _
    $region11: #{net_forward.1} parent=1 // pred_check_branch
      %34 = sbr.rel (0) target = $region13
    $region12: #{net_forward.1} parent=1 // pred_region
      %36 = dma.done [#allocation4], 128
    $region13: #{net_forward.1} parent=1 // pred_fallthru
      _
    // Predicated region
    $region14: #{net_forward.1} parent=1 // pred_check
      _
    $region15: #{net_forward.1} parent=1 // pred_check_branch
      %38 = sbr.rel (0) target = $region17
    $region16: #{net_forward.1} parent=1 // pred_region
      %40 = dma.done [#allocation6], 6272
    $region17: #{net_forward.1} parent=1 // pred_fallthru
      _
    %41 = vst [vmem:[#allocation2] sm:$0xff] 0.0
    %v42 = vld [vmem:[#allocation3] sm:$0xff]
    %vm43 = vcmask 97280
    %44 = vst.msk [vmem:[#allocation2] sm:$0xff] %vm43, %v42
    %v45 = vld [vmem:[#allocation2] sm:$0xff]
    %v46 = vld [vmem:[#allocation5] sm:$0xff]
    %v47 = vld [vmem:[#allocation5 + $0x8] sm:$0xff]
    %v48 = vld [vmem:[#allocation5 + $0x10] sm:$0xff]
    %v49 = vld [vmem:[#allocation5 + $0x18] sm:$0xff]
    %v50 = vld [vmem:[#allocation5 + $0x20] sm:$0xff]
    %v51 = vld [vmem:[#allocation5 + $0x28] sm:$0xff]
    %v52 = vld [vmem:[#allocation5 + $0x30] sm:$0xff]
    %v53 = vld [vmem:[#allocation5 + $0x38] sm:$0xff]
    %v54 = vld [vmem:[#allocation5 + $0x40] sm:$0xff]
    %v55 = vld [vmem:[#allocation5 + $0x48] sm:$0xff]
    %v56 = vld [vmem:[#allocation5 + $0x50] sm:$0xff]
    %v57 = vld [vmem:[#allocation5 + $0x58] sm:$0xff]
    %v58 = vld [vmem:[#allocation5 + $0x60] sm:$0xff]
    %v59 = vld [vmem:[#allocation5 + $0x68] sm:$0xff]
    %v60 = vld [vmem:[#allocation5 + $0x70] sm:$0xff]
    %v61 = vld [vmem:[#allocation5 + $0x78] sm:$0xff]
    %v62 = vld [vmem:[#allocation5 + $0x80] sm:$0xff]
    %v63 = vld [vmem:[#allocation5 + $0x88] sm:$0xff]
    %v64 = vld [vmem:[#allocation5 + $0x90] sm:$0xff]
    %v65 = vld [vmem:[#allocation5 + $0x98] sm:$0xff]
    %v66 = vld [vmem:[#allocation5 + $0xa0] sm:$0xff]
    %v67 = vld [vmem:[#allocation5 + $0xa8] sm:$0xff]
    %v68 = vld [vmem:[#allocation5 + $0xb0] sm:$0xff]
    %v69 = vld [vmem:[#allocation5 + $0xb8] sm:$0xff]
    %v70 = vld [vmem:[#allocation5 + $0xc0] sm:$0xff]
    %v71 = vld [vmem:[#allocation5 + $0xc8] sm:$0xff]
    %v72 = vld [vmem:[#allocation5 + $0xd0] sm:$0xff]
    %v73 = vld [vmem:[#allocation5 + $0xd8] sm:$0xff]
    %v74 = vld [vmem:[#allocation5 + $0xe0] sm:$0xff]
    %v75 = vld [vmem:[#allocation5 + $0xe8] sm:$0xff]
    %v76 = vld [vmem:[#allocation5 + $0xf0] sm:$0xff]
    %v77 = vld [vmem:[#allocation5 + $0xf8] sm:$0xff]
    %v78 = vld [vmem:[#allocation5 + $0x100] sm:$0xff]
    %v79 = vld [vmem:[#allocation5 + $0x108] sm:$0xff]
    %v80 = vld [vmem:[#allocation5 + $0x110] sm:$0xff]
    %v81 = vld [vmem:[#allocation5 + $0x118] sm:$0xff]
    %v82 = vld [vmem:[#allocation5 + $0x120] sm:$0xff]
    %v83 = vld [vmem:[#allocation5 + $0x128] sm:$0xff]
    %v84 = vld [vmem:[#allocation5 + $0x130] sm:$0xff]
    %v85 = vld [vmem:[#allocation5 + $0x138] sm:$0xff]
    %v86 = vld [vmem:[#allocation5 + $0x140] sm:$0xff]
    %v87 = vld [vmem:[#allocation5 + $0x148] sm:$0xff]
    %v88 = vld [vmem:[#allocation5 + $0x150] sm:$0xff]
    %v89 = vld [vmem:[#allocation5 + $0x158] sm:$0xff]
    %v90 = vld [vmem:[#allocation5 + $0x160] sm:$0xff]
    %v91 = vld [vmem:[#allocation5 + $0x168] sm:$0xff]
    %v92 = vld [vmem:[#allocation5 + $0x170] sm:$0xff]
    %v93 = vld [vmem:[#allocation5 + $0x178] sm:$0xff]
    %v94 = vld [vmem:[#allocation5 + $0x180] sm:$0xff]
    %v95 = vperm.slane %v94, 0
    %96 = vmatpush.msra.mxu0 %v61
    %97 = vmatpush.msra.mxu0 %v60
    %98 = vmatpush.msra.mxu0 %v59
    %99 = vmatpush.msra.mxu0 %v58
    %100 = vmatpush.msra.mxu0 %v57
    %101 = vmatpush.msra.mxu0 %v56
    %102 = vmatpush.msra.mxu0 %v55
    %103 = vmatpush.msra.mxu0 %v54
    %104 = vmatpush.msra.mxu0 %v53
    %105 = vmatpush.msra.mxu0 %v52
    %106 = vmatpush.msra.mxu0 %v51
    %107 = vmatpush.msra.mxu0 %v50
    %108 = vmatpush.msra.mxu0 %v49
    %109 = vmatpush.msra.mxu0 %v48
    %110 = vmatpush.msra.mxu0 %v47
    %111 = vmatpush.msra.mxu0 %v46
    %112 = vmatmul.f32.gmra.mxu0 %v45
    %v113 = vpop.f32.mrf.mxu0
    %v114 = vadd.f32 %v95, %v113
    %115 = vdwg.mxu0
    %v116 = vmax.f32 %v114, 0.0
    %v117 = vperm.slane %v94, 1
    %118 = vmatpush.msra.mxu0 %v77
    %119 = vmatpush.msra.mxu0 %v76
    %120 = vmatpush.msra.mxu0 %v75
    %121 = vmatpush.msra.mxu0 %v74
    %122 = vmatpush.msra.mxu0 %v73
    %123 = vmatpush.msra.mxu0 %v72
    %124 = vmatpush.msra.mxu0 %v71
    %125 = vmatpush.msra.mxu0 %v70
    %126 = vmatpush.msra.mxu0 %v69
    %127 = vmatpush.msra.mxu0 %v68
    %128 = vmatpush.msra.mxu0 %v67
    %129 = vmatpush.msra.mxu0 %v66
    %130 = vmatpush.msra.mxu0 %v65
    %131 = vmatpush.msra.mxu0 %v64
    %132 = vmatpush.msra.mxu0 %v63
    %133 = vmatpush.msra.mxu0 %v62
    %134 = vmatmul.f32.gmra.mxu0 %v116
    %v135 = vpop.f32.mrf.mxu0
    %v136 = vadd.f32 %v117, %v135
    %137 = vdwg.mxu0
    %v138 = vmax.f32 %v136, 0.0
    %v139 = vperm.slane %v94, 2
    %140 = vmatpush.msra.mxu0 %v93
    %141 = vmatpush.msra.mxu0 %v92
    %142 = vmatpush.msra.mxu0 %v91
    %143 = vmatpush.msra.mxu0 %v90
    %144 = vmatpush.msra.mxu0 %v89
    %145 = vmatpush.msra.mxu0 %v88
    %146 = vmatpush.msra.mxu0 %v87
    %147 = vmatpush.msra.mxu0 %v86
    %148 = vmatpush.msra.mxu0 %v85
    %149 = vmatpush.msra.mxu0 %v84
    %150 = vmatpush.msra.mxu0 %v83
    %151 = vmatpush.msra.mxu0 %v82
    %152 = vmatpush.msra.mxu0 %v81
    %153 = vmatpush.msra.mxu0 %v80
    %154 = vmatpush.msra.mxu0 %v79
    %155 = vmatpush.msra.mxu0 %v78
    %156 = vmatmul.f32.gmra.mxu0 %v138
    %v157 = vpop.f32.mrf.mxu0
    %v158 = vadd.f32 %v139, %v157
    %159 = vdwg.mxu0
    %vm160 = vcmask 31744
    %161 = vst.msk [vmem:[%s2] sm:$0xff] %vm160, %v158
    // Predicated region
    $region18: #{net_forward.1} parent=1 // pred_check
      _
    $region19: #{net_forward.1} parent=1 // pred_check_branch
      %163 = sbr.rel (0) target = $region21
    $region20: #{net_forward.1} parent=1 // pred_region
      _
    $region21: #{net_forward.1} parent=1 // pred_fallthru
      _
    // Predicated region
    $region22: #{net_forward.1} parent=1 // pred_check
      _
    $region23: #{net_forward.1} parent=1 // pred_check_branch
      %165 = sbr.rel (0) target = $region25
    $region24: #{net_forward.1} parent=1 // pred_region
      _
    $region25: #{net_forward.1} parent=1 // pred_fallthru
      _
    %166 = vsyncpa [#allocation4], 1
    %167 = vsyncpa [#allocation6], 1

</llo_original>
